<compile_context>
chip_gen: v7x
topology: tpu7x:2x2x1
jax: 0.10.0
libtpu: 0.0.40
codegen_flags: <defaults>
</compile_context>

<pallas_src>
import math

import jax
import jax.numpy as jnp
from jax.experimental import pallas as pl
from jax.experimental.pallas import tpu as pltpu


def _round_up(x: int, m: int) -> int:
    return (x + m - 1) // m * m


def _vmem_tile_bytes(rows: int, cols: int, itemsize: int = 4) -> int:
    # VMEM tiles are laid out in (8, 128) f32 tiles; account for lane padding.
    return _round_up(max(rows, 1), 8) * _round_up(max(cols, 1), 128) * itemsize


def _pick_batch_tile(B: int, block_b: int) -> int:
    """Pick the batch tile TB (multiple of 16)."""
    TB = min(block_b, max(16, _round_up(B, 16)))
    # Bound whole-tile batch padding to <~12.5% of the real rows.
    while TB > 16 and (_round_up(B, TB) - B) * 8 > B:
        TB = max(16, _round_up(TB // 2, 16))
    # Keep >= 2 grid steps (v7x has 2 TensorCores) once B is large enough to
    # amortize the ~0.35us per-grid-step overhead.
    if B >= 512 and _round_up(B, TB) // TB < 2:
        TB = max(16, _round_up((B + 1) // 2, 16))
    return TB


def _mlp_kernel(x_ref, w1_ref, b1_ref, w2_ref, b2_ref, o_ref):
    # x_ref: [TB, K] f32; w1_ref: [K, H]; b1_ref: [1, H]; w2_ref: [H, N];
    # b2_ref: [1, N]; o_ref: [TB, N].
    x = x_ref[...]
    # Linear 1 on the MXU (f32 via HIGHEST precision), bias + ReLU on the VPU.
    h = jnp.dot(x, w1_ref[...], preferred_element_type=jnp.float32,
                precision=jax.lax.Precision.HIGHEST)
    h = jnp.maximum(h + b1_ref[...], 0.0)
    # Linear 2.
    y = jnp.dot(h, w2_ref[...], preferred_element_type=jnp.float32,
                precision=jax.lax.Precision.HIGHEST)
    y = y + b2_ref[...]
    # Sigmoid: exp lands on the otherwise-idle EUP slot.
    o_ref[...] = (1.0 / (1.0 + jnp.exp(-y))).astype(o_ref.dtype)


def torch_model_forward(x, w1, b1, w2, b2, *, block_b: int = 1024):
    """x: [B, n_input]; w1: [n_input, n_hidden]; b1: [1, n_hidden] or [n_hidden];
    w2: [n_hidden, n_out]; b2: [1, n_out] or [n_out] -> [B, n_out] (x.dtype)."""
    B, n_input = x.shape
    n_hidden = w1.shape[1]
    n_out = w2.shape[1]
    out_dtype = x.dtype

    # Parameters: f32, (1, n) biases. (init_params already returns this form;
    # these reshapes/casts are no-ops then and never touch HBM per call.)
    w1 = w1.astype(jnp.float32)
    w2 = w2.astype(jnp.float32)
    b1 = b1.reshape(1, n_hidden).astype(jnp.float32)
    b2 = b2.reshape(1, n_out).astype(jnp.float32)

    TB = _pick_batch_tile(B, block_b)
    Bp = _round_up(B, TB)

    # Only batch padding; feature dims use full-extent blocks (no lane padding
    # written to / read from HBM). No dtype cast round trip for x.
    xp = x if Bp == B else jnp.pad(x, ((0, Bp - B), (0, 0)))

    # VMEM budget: double-buffered x/out tiles + (double-buffered) resident
    # weights/biases, plus compiler scratch headroom. Cap generation-aware.
    vmem_est = (2 * (_vmem_tile_bytes(TB, n_input) + _vmem_tile_bytes(TB, n_out))
                + 2 * (_vmem_tile_bytes(n_input, n_hidden)
                       + _vmem_tile_bytes(1, n_hidden)
                       + _vmem_tile_bytes(n_hidden, n_out)
                       + _vmem_tile_bytes(1, n_out))
                + (2 << 20))
    try:
        vmem_cap = int(pltpu.get_tpu_info().vmem_capacity_bytes)
    except Exception:
        vmem_cap = 64 << 20  # safe lower bound (v7x per-core VMEM)
    vmem_limit = int(min(max(vmem_est, 8 << 20), vmem_cap * 3 // 4))

    cost = pl.CostEstimate(
        flops=2 * Bp * n_input * n_hidden + 2 * Bp * n_hidden * n_out,
        transcendentals=Bp * n_out,
        bytes_accessed=4 * (Bp * n_input + n_input * n_hidden + n_hidden
                            + n_hidden * n_out + n_out + Bp * n_out),
    )

    out_p = pl.pallas_call(
        _mlp_kernel,
        out_shape=jax.ShapeDtypeStruct((Bp, n_out), out_dtype),
        grid_spec=pltpu.PrefetchScalarGridSpec(
            num_scalar_prefetch=0,
            grid=(Bp // TB,),
            in_specs=[
                pl.BlockSpec((TB, n_input), lambda i: (i, 0)),    # x tile (pipelined)
                pl.BlockSpec((n_input, n_hidden), lambda i: (0, 0)),  # w1 (resident)
                pl.BlockSpec((1, n_hidden), lambda i: (0, 0)),        # b1
                pl.BlockSpec((n_hidden, n_out), lambda i: (0, 0)),    # w2 (resident)
                pl.BlockSpec((1, n_out), lambda i: (0, 0)),           # b2
            ],
            out_specs=pl.BlockSpec((TB, n_out), lambda i: (i, 0)),
        ),
        compiler_params=pltpu.CompilerParams(
            dimension_semantics=("parallel",),
            vmem_limit_bytes=vmem_limit,
        ),
        cost_estimate=cost,
    )(xp, w1, b1, w2, b2)

    return out_p[:B]


def init_params(key, n_input, n_hidden, n_out, dtype=jnp.float32):
    """Deterministic PyTorch-style init: U(-1/sqrt(fan_in), 1/sqrt(fan_in)).
    Weights stored transposed relative to torch.nn.Linear.weight ([out,in]->[in,out]).
    Returned in kernel-ready form (f32, (1, n) biases) so the forward path does
    no per-call parameter reshaping/casting."""
    k1, k2, k3, k4 = jax.random.split(key, 4)
    bound1 = 1.0 / math.sqrt(n_input)
    bound2 = 1.0 / math.sqrt(n_hidden)
    w1 = jax.random.uniform(k1, (n_input, n_hidden), dtype, -bound1, bound1)
    b1 = jax.random.uniform(k2, (1, n_hidden), dtype, -bound1, bound1)
    w2 = jax.random.uniform(k3, (n_hidden, n_out), dtype, -bound2, bound2)
    b2 = jax.random.uniform(k4, (1, n_out), dtype, -bound2, bound2)
    return w1, b1, w2, b2


if __name__ == "__main__":
    # Small shapes consistent with the module: batch=8, n_input=32, n_hidden=32, n_out=8
    B, n_input, n_hidden, n_out = 8, 32, 32, 8

    key = jax.random.PRNGKey(0)
    kx, kp = jax.random.split(key)
    x = jax.random.normal(kx, (B, n_input), dtype=jnp.float32)
    w1, b1, w2, b2 = init_params(kp, n_input, n_hidden, n_out)

    out = torch_model_forward(x, w1, b1, w2, b2)
    out = jax.block_until_ready(out)
    assert out.shape == (B, n_out)
    assert out.dtype == jnp.float32

    # Pure-f32 reference matching the PyTorch module's math.
    hi = jax.lax.Precision.HIGHEST
    h_ref = jnp.maximum(
        jnp.dot(x, w1, precision=hi, preferred_element_type=jnp.float32) + b1, 0.0)
    ref = jax.nn.sigmoid(
        jnp.dot(h_ref, w2, precision=hi, preferred_element_type=jnp.float32) + b2)
    assert jnp.allclose(out, ref, atol=1e-5, rtol=1e-5)
    assert bool(jnp.all((out >= 0.0) & (out <= 1.0)))

    print("KERNEL_OK")
</pallas_src>

<mosaic_0001>
module attributes {stable_mosaic.version = 11 : i64} {
  func.func @_mlp_kernel(%arg0: i32, %arg1: memref<16x32xf32, #tpu.memory_space<vmem>>, %arg2: memref<32x32xf32, #tpu.memory_space<vmem>>, %arg3: memref<1x32xf32, #tpu.memory_space<vmem>>, %arg4: memref<32x8xf32, #tpu.memory_space<vmem>>, %arg5: memref<1x8xf32, #tpu.memory_space<vmem>>, %arg6: memref<16x8xf32, #tpu.memory_space<vmem>>) attributes {dimension_semantics = [#tpu.dimension_semantics<parallel>], iteration_bounds = array<i64: 1>, scalar_prefetch = 0 : i64, scratch_operands = 0 : i64, tpu.core_type = #tpu.core_type<tc>, window_params = [{transform_indices = @transform_0, window_bounds = array<i64: 16, 32>}, {pipeline_mode = #tpu.pipeline_mode<synchronous>, transform_indices = @transform_1, window_bounds = array<i64: 32, 32>}, {pipeline_mode = #tpu.pipeline_mode<synchronous>, transform_indices = @transform_2, window_bounds = array<i64: 1, 32>}, {pipeline_mode = #tpu.pipeline_mode<synchronous>, transform_indices = @transform_3, window_bounds = array<i64: 32, 8>}, {pipeline_mode = #tpu.pipeline_mode<synchronous>, transform_indices = @transform_4, window_bounds = array<i64: 1, 8>}, {transform_indices = @transform_5, window_bounds = array<i64: 16, 8>}]} {
    %c0 = arith.constant 0 : index
    %c0_0 = arith.constant 0 : index
    %0 = vector.load %arg1[%c0, %c0_0] : memref<16x32xf32, #tpu.memory_space<vmem>>, vector<16x32xf32>
    %c0_1 = arith.constant 0 : index
    %c0_2 = arith.constant 0 : index
    %1 = vector.load %arg2[%c0_1, %c0_2] : memref<32x32xf32, #tpu.memory_space<vmem>>, vector<32x32xf32>
    %cst = arith.constant dense<0.000000e+00> : vector<16x32xf32>
    %2 = tpu.matmul %0, %1, %cst {dimension_numbers = #tpu.dot_dimension_numbers<[1], [0], [0], [1], [0, 0, 1, 1], [], []>, precision = #tpu.contract_precision<fp32>} : vector<16x32xf32>, vector<32x32xf32>, vector<16x32xf32> -> vector<16x32xf32>
    %c0_3 = arith.constant 0 : index
    %c0_4 = arith.constant 0 : index
    %3 = vector.load %arg3[%c0_3, %c0_4] : memref<1x32xf32, #tpu.memory_space<vmem>>, vector<1x32xf32>
    %4 = vector.broadcast %3 : vector<1x32xf32> to vector<16x32xf32>
    %5 = arith.addf %2, %4 : vector<16x32xf32>
    %cst_5 = arith.constant 0.000000e+00 : f32
    %6 = vector.broadcast %cst_5 : f32 to vector<16x32xf32>
    %7 = arith.maximumf %5, %6 : vector<16x32xf32>
    %c0_6 = arith.constant 0 : index
    %c0_7 = arith.constant 0 : index
    %8 = vector.load %arg4[%c0_6, %c0_7] : memref<32x8xf32, #tpu.memory_space<vmem>>, vector<32x8xf32>
    %cst_8 = arith.constant dense<0.000000e+00> : vector<16x8xf32>
    %9 = tpu.matmul %7, %8, %cst_8 {dimension_numbers = #tpu.dot_dimension_numbers<[1], [0], [0], [1], [0, 0, 1, 1], [], []>, precision = #tpu.contract_precision<fp32>} : vector<16x32xf32>, vector<32x8xf32>, vector<16x8xf32> -> vector<16x8xf32>
    %c0_9 = arith.constant 0 : index
    %c0_10 = arith.constant 0 : index
    %10 = vector.load %arg5[%c0_9, %c0_10] : memref<1x8xf32, #tpu.memory_space<vmem>>, vector<1x8xf32>
    %11 = vector.broadcast %10 : vector<1x8xf32> to vector<16x8xf32>
    %12 = arith.addf %9, %11 : vector<16x8xf32>
    %cst_11 = arith.constant 0.000000e+00 : f32
    %13 = vector.broadcast %cst_11 : f32 to vector<16x8xf32>
    %14 = arith.subf %13, %12 : vector<16x8xf32>
    %15 = math.exp %14 : vector<16x8xf32>
    %cst_12 = arith.constant 1.000000e+00 : f32
    %16 = vector.broadcast %cst_12 : f32 to vector<16x8xf32>
    %17 = arith.addf %16, %15 : vector<16x8xf32>
    %cst_13 = arith.constant 1.000000e+00 : f32
    %18 = vector.broadcast %cst_13 : f32 to vector<16x8xf32>
    %19 = arith.divf %18, %17 : vector<16x8xf32>
    %c0_14 = arith.constant 0 : index
    %c0_15 = arith.constant 0 : index
    %20 = vector.load %arg6[%c0_14, %c0_15] : memref<16x8xf32, #tpu.memory_space<vmem>>, vector<16x8xf32>
    tpu.vector_store %arg6[%c0_14, %c0_15], %19 {strides = array<i32>} : memref<16x8xf32, #tpu.memory_space<vmem>>, vector<16x8xf32>,
    return
  }
  func.func @transform_0(%arg0: i32) -> (i32, i32) {
    %c0_i32 = arith.constant 0 : i32
    %c0_i32_0 = arith.constant 0 : i32
    return %arg0, %c0_i32 : i32, i32
  }
  func.func @transform_1(%arg0: i32) -> (i32, i32) {
    %c0_i32 = arith.constant 0 : i32
    %c0_i32_0 = arith.constant 0 : i32
    %c0_i32_1 = arith.constant 0 : i32
    return %c0_i32, %c0_i32_0 : i32, i32
  }
  func.func @transform_2(%arg0: i32) -> (i32, i32) {
    %c0_i32 = arith.constant 0 : i32
    %c0_i32_0 = arith.constant 0 : i32
    %c0_i32_1 = arith.constant 0 : i32
    return %c0_i32, %c0_i32_0 : i32, i32
  }
  func.func @transform_3(%arg0: i32) -> (i32, i32) {
    %c0_i32 = arith.constant 0 : i32
    %c0_i32_0 = arith.constant 0 : i32
    %c0_i32_1 = arith.constant 0 : i32
    return %c0_i32, %c0_i32_0 : i32, i32
  }
  func.func @transform_4(%arg0: i32) -> (i32, i32) {
    %c0_i32 = arith.constant 0 : i32
    %c0_i32_0 = arith.constant 0 : i32
    %c0_i32_1 = arith.constant 0 : i32
    return %c0_i32, %c0_i32_0 : i32, i32
  }
  func.func @transform_5(%arg0: i32) -> (i32, i32) {
    %c0_i32 = arith.constant 0 : i32
    %c0_i32_0 = arith.constant 0 : i32
    return %arg0, %c0_i32 : i32, i32
  }
}

</mosaic_0001>

<llo_original>
// kernel: tpu_custom_call.1
$region0: #{tpu_custom_call.1}
  #allocation0 [shape = 'u32[]', space=smem, size = 0x4, offset = 0x4, fixed_abs, tag = 'smem constant byte address 0x4 - core index']
  #allocation1 [shape = 'u32[144,128]{1,0:T(1,128)}', space=vmem, size = 0x12000, scoped, tag = 'internal scratch']
  %s0 = inlined_call_operand.hbm [shape: f32[16,32], index: 0, kind: input, shape index: {}]
  %s1 = inlined_call_operand.vmem [shape: f32[32,32], index: 1, kind: input, shape index: {}]
  %s2 = inlined_call_operand.vmem [shape: f32[1,32], index: 2, kind: input, shape index: {}]
  %s3 = inlined_call_operand.vmem [shape: f32[32,8], index: 3, kind: input, shape index: {}]
  %s4 = inlined_call_operand.vmem [shape: f32[1,8], index: 4, kind: input, shape index: {}]
  %s5 = inlined_call_operand.vmem [shape: f32[16,8], index: 5, kind: output, shape index: {}]
  %s6 = sld [smem:[#allocation0]]
  $region34: #{tpu_custom_call.1} parent=0
    _
  %s8 = ssub.s32 1, %s6
  %s9 = scalar_select 0, %s8, %s6
  $region1: #{tpu_custom_call.1} parent=0
    #allocation2 [shape = 'u8[8192]{0}', space=vmem, size = 0x2000, scoped, tag = 'input window, operand 0, single buffered']
    #allocation3 [shape = 's32[1]{0}', space=sflag, size = 0x4, scoped, tag = 'scoped memory for tpu_custom_call.1']
    %10 = vsyncpa [#allocation3], 0
    // Predicated region
    $region2: #{tpu_custom_call.1} parent=1 // pred_check
      _
    $region3: #{tpu_custom_call.1} parent=1 // pred_check_branch
      %12 = sbr.rel (0) target = $region5
    $region4: #{tpu_custom_call.1} parent=1 // pred_region
      %s14 = ssub.s32 256, 256
      %15 = vsyncadd [#allocation3], %s14
      %s16 = sshll.u32 [#allocation2], 4
      %s17 = int_to_ptr.vmem [resolvable:$true] %s16
      %22 = dma.hbm_to_vmem [thread:$0]  %s0, 256, %s17, [#allocation3], 128, 128, 8
    $region5: #{tpu_custom_call.1} parent=1 // pred_fallthru
      _
    // Predicated region
    $region6: #{tpu_custom_call.1} parent=1 // pred_check
      _
    $region7: #{tpu_custom_call.1} parent=1 // pred_check_branch
      %24 = sbr.rel (0) target = $region9
    $region8: #{tpu_custom_call.1} parent=1 // pred_region
      _
    $region9: #{tpu_custom_call.1} parent=1 // pred_fallthru
      _
    // Predicated region
    $region10: #{tpu_custom_call.1} parent=1 // pred_check
      _
    $region11: #{tpu_custom_call.1} parent=1 // pred_check_branch
      %26 = sbr.rel (0) target = $region13
    $region12: #{tpu_custom_call.1} parent=1 // pred_region
      _
    $region13: #{tpu_custom_call.1} parent=1 // pred_fallthru
      _
    // Predicated region
    $region14: #{tpu_custom_call.1} parent=1 // pred_check
      _
    $region15: #{tpu_custom_call.1} parent=1 // pred_check_branch
      %28 = sbr.rel (0) target = $region17
    $region16: #{tpu_custom_call.1} parent=1 // pred_region
      _
    $region17: #{tpu_custom_call.1} parent=1 // pred_fallthru
      _
    // Predicated region
    $region18: #{tpu_custom_call.1} parent=1 // pred_check
      _
    $region19: #{tpu_custom_call.1} parent=1 // pred_check_branch
      %30 = sbr.rel (0) target = $region21
    $region20: #{tpu_custom_call.1} parent=1 // pred_region
      _
    $region21: #{tpu_custom_call.1} parent=1 // pred_fallthru
      _
    // Predicated region
    $region22: #{tpu_custom_call.1} parent=1 // pred_check
      _
    $region23: #{tpu_custom_call.1} parent=1 // pred_check_branch
      %32 = sbr.rel (0) target = $region25
    $region24: #{tpu_custom_call.1} parent=1 // pred_region
      %33 = dma.done [#allocation3], 256
    $region25: #{tpu_custom_call.1} parent=1 // pred_fallthru
      _
    %v34 = vld [vmem:[#allocation2] sm:$0xff]
    %v35 = vld [vmem:[#allocation2 + $0x8] sm:$0xff]
    %v36 = vld [vmem:[%s1] sm:$0xff]
    %v37 = vld [vmem:[%s1 + $0x8] sm:$0xff]
    %v38 = vld [vmem:[%s1 + $0x10] sm:$0xff]
    %v39 = vld [vmem:[%s1 + $0x18] sm:$0xff]
    %v40 = vld [vmem:[%s2] sm:$0x1]
    %v42 = vlaneseq
    %v43 = vshrl.u32 %v42, 7
    %v44 = vsub.s32 0, %v43
    %v45 = vrot.slane %v40, %v44
    %vm47 = vcmask 261120
    %v49 = vsel %vm47, %v34, 0
    %v52 = vsel %vm47, %v35, 0
    %54 = vmatprep.subr.mxu0 0.0
    %v55 = vand.u32 %v36, 4294901760
    %56 = vmatpush1.msra.mxu0 %v55
    %57 = vmatprep.subr.mxu0 0.0
    %v58 = vand.u32 %v37, 4294901760
    %59 = vmatpush1.msra.mxu0 %v58
    %60 = vmatprep.subr.mxu0 0.0
    %v61 = vand.u32 %v38, 4294901760
    %62 = vmatpush1.msra.mxu0 %v61
    %63 = vmatprep.subr.mxu0 0.0
    %v64 = vand.u32 %v39, 4294901760
    %65 = vmatpush1.msra.mxu0 %v64
    %66 = vmatprep.subr.mxu0 0.0
    %67 = vmatpush1.msra.mxu0 0.0
    %68 = vmatprep.subr.mxu0 0.0
    %69 = vmatpush1.msra.mxu0 0.0
    %70 = vmatprep.subr.mxu0 0.0
    %71 = vmatpush1.msra.mxu0 0.0
    %72 = vmatprep.subr.mxu0 0.0
    %73 = vmatpush1.msra.mxu0 0.0
    %74 = vmatprep.subr.mxu0 0.0
    %75 = vmatpush1.msra.mxu0 0.0
    %76 = vmatprep.subr.mxu0 0.0
    %77 = vmatpush1.msra.mxu0 0.0
    %78 = vmatprep.subr.mxu0 0.0
    %79 = vmatpush1.msra.mxu0 0.0
    %80 = vmatprep.subr.mxu0 0.0
    %81 = vmatpush1.msra.mxu0 0.0
    %82 = vmatprep.subr.mxu0 0.0
    %83 = vmatpush1.msra.mxu0 0.0
    %84 = vmatprep.subr.mxu0 0.0
    %85 = vmatpush1.msra.mxu0 0.0
    %86 = vmatprep.subr.mxu0 0.0
    %87 = vmatpush1.msra.mxu0 0.0
    %88 = vmatprep.subr.mxu0 0.0
    %89 = vmatpush1.msra.mxu0 0.0
    %90 = vmatprep.subr.mxu0 0.0
    %91 = vmatpush1.msra.mxu0 0.0
    %92 = vmatprep.subr.mxu0 0.0
    %93 = vmatpush1.msra.mxu0 0.0
    %94 = vmatprep.subr.mxu0 0.0
    %95 = vmatpush1.msra.mxu0 0.0
    %96 = vmatprep.subr.mxu0 0.0
    %97 = vmatpush1.msra.mxu0 0.0
    %98 = vmatprep.subr.mxu0 0.0
    %99 = vmatpush1.msra.mxu0 0.0
    %100 = vmatprep.subr.mxu0 0.0
    %101 = vmatpush1.msra.mxu0 0.0
    %102 = vmatprep.subr.mxu0 0.0
    %103 = vmatpush1.msra.mxu0 0.0
    %104 = vmatprep.subr.mxu0 0.0
    %105 = vmatpush1.msra.mxu0 0.0
    %106 = vmatprep.subr.mxu0 0.0
    %107 = vmatpush1.msra.mxu0 0.0
    %108 = vmatprep.subr.mxu0 0.0
    %109 = vmatpush1.msra.mxu0 0.0
    %110 = vmatprep.subr.mxu0 0.0
    %111 = vmatpush1.msra.mxu0 0.0
    %112 = vmatprep.subr.mxu0 0.0
    %113 = vmatpush1.msra.mxu0 0.0
    %114 = vmatprep.subr.mxu0 0.0
    %115 = vmatpush1.msra.mxu0 0.0
    %116 = vmatprep.subr.mxu0 0.0
    %117 = vmatpush1.msra.mxu0 0.0
    %118 = vmatprep.subr.mxu0 0.0
    %119 = vmatpush1.msra.mxu0 0.0
    %120 = vmatprep.subr.mxu0 0.0
    %121 = vmatpush1.msra.mxu0 0.0
    %122 = vmatprep.mubr.f32.mxu0 0.0
    %v123 = vand.u32 %v49, 4294901760
    %v124 = vsub.f32 %v49, %v123
    %v125 = vand.u32 %v124, 4294901760
    %v126 = vsub.f32 %v124, %v125
    %v127 = vand.u32 %v126, 4294901760
    %128 = vmatmul.mubr.f32.gmra.mrb[0].mxu0 %v127
    %v129 = vpop.f32.mrb[0].mxu0
    %v130 = vadd.f32 %v45, %v129
    %v131 = vpop.f32.mrb[0].mxu0
    %132 = vmatprep.mubr.f32.mxu0 0.0
    %v133 = vand.u32 %v52, 4294901760
    %v134 = vsub.f32 %v52, %v133
    %v135 = vand.u32 %v134, 4294901760
    %v136 = vsub.f32 %v134, %v135
    %v137 = vand.u32 %v136, 4294901760
    %138 = vmatmul.mubr.f32.gmra.mrb[0].mxu0 %v137
    %v139 = vpop.f32.mrb[0].mxu0
    %v140 = vadd.f32 %v45, %v139
    %v141 = vpop.f32.mrb[0].mxu0
    %142 = vdwg.mxu0
    %143 = vmatprep.subr.mxu0 0.0
    %v144 = vand.u32 %v36, 4294901760
    %v145 = vsub.f32 %v36, %v144
    %v146 = vand.u32 %v145, 4294901760
    %v147 = vsub.f32 %v145, %v146
    %v148 = vand.u32 %v147, 4294901760
    %149 = vmatpush1.msra.mxu0 %v148
    %150 = vmatprep.subr.mxu0 0.0
    %v151 = vand.u32 %v37, 4294901760
    %v152 = vsub.f32 %v37, %v151
    %v153 = vand.u32 %v152, 4294901760
    %v154 = vsub.f32 %v152, %v153
    %v155 = vand.u32 %v154, 4294901760
    %156 = vmatpush1.msra.mxu0 %v155
    %157 = vmatprep.subr.mxu0 0.0
    %v158 = vand.u32 %v38, 4294901760
    %v159 = vsub.f32 %v38, %v158
    %v160 = vand.u32 %v159, 4294901760
    %v161 = vsub.f32 %v159, %v160
    %v162 = vand.u32 %v161, 4294901760
    %163 = vmatpush1.msra.mxu0 %v162
    %164 = vmatprep.subr.mxu0 0.0
    %v165 = vand.u32 %v39, 4294901760
    %v166 = vsub.f32 %v39, %v165
    %v167 = vand.u32 %v166, 4294901760
    %v168 = vsub.f32 %v166, %v167
    %v169 = vand.u32 %v168, 4294901760
    %170 = vmatpush1.msra.mxu0 %v169
    %171 = vmatprep.subr.mxu0 0.0
    %172 = vmatpush1.msra.mxu0 0.0
    %173 = vmatprep.subr.mxu0 0.0
    %174 = vmatpush1.msra.mxu0 0.0
    %175 = vmatprep.subr.mxu0 0.0
    %176 = vmatpush1.msra.mxu0 0.0
    %177 = vmatprep.subr.mxu0 0.0
    %178 = vmatpush1.msra.mxu0 0.0
    %179 = vmatprep.subr.mxu0 0.0
    %180 = vmatpush1.msra.mxu0 0.0
    %181 = vmatprep.subr.mxu0 0.0
    %182 = vmatpush1.msra.mxu0 0.0
    %183 = vmatprep.subr.mxu0 0.0
    %184 = vmatpush1.msra.mxu0 0.0
    %185 = vmatprep.subr.mxu0 0.0
    %186 = vmatpush1.msra.mxu0 0.0
    %187 = vmatprep.subr.mxu0 0.0
    %188 = vmatpush1.msra.mxu0 0.0
    %189 = vmatprep.subr.mxu0 0.0
    %190 = vmatpush1.msra.mxu0 0.0
    %191 = vmatprep.subr.mxu0 0.0
    %192 = vmatpush1.msra.mxu0 0.0
    %193 = vmatprep.subr.mxu0 0.0
    %194 = vmatpush1.msra.mxu0 0.0
    %195 = vmatprep.subr.mxu0 0.0
    %196 = vmatpush1.msra.mxu0 0.0
    %197 = vmatprep.subr.mxu0 0.0
    %198 = vmatpush1.msra.mxu0 0.0
    %199 = vmatprep.subr.mxu0 0.0
    %200 = vmatpush1.msra.mxu0 0.0
    %201 = vmatprep.subr.mxu0 0.0
    %202 = vmatpush1.msra.mxu0 0.0
    %203 = vmatprep.subr.mxu0 0.0
    %204 = vmatpush1.msra.mxu0 0.0
    %205 = vmatprep.subr.mxu0 0.0
    %206 = vmatpush1.msra.mxu0 0.0
    %207 = vmatprep.subr.mxu0 0.0
    %208 = vmatpush1.msra.mxu0 0.0
    %209 = vmatprep.subr.mxu0 0.0
    %210 = vmatpush1.msra.mxu0 0.0
    %211 = vmatprep.subr.mxu0 0.0
    %212 = vmatpush1.msra.mxu0 0.0
    %213 = vmatprep.subr.mxu0 0.0
    %214 = vmatpush1.msra.mxu0 0.0
    %215 = vmatprep.subr.mxu0 0.0
    %216 = vmatpush1.msra.mxu0 0.0
    %217 = vmatprep.subr.mxu0 0.0
    %218 = vmatpush1.msra.mxu0 0.0
    %219 = vmatprep.subr.mxu0 0.0
    %220 = vmatpush1.msra.mxu0 0.0
    %221 = vmatprep.subr.mxu0 0.0
    %222 = vmatpush1.msra.mxu0 0.0
    %223 = vmatprep.subr.mxu0 0.0
    %224 = vmatpush1.msra.mxu0 0.0
    %225 = vmatprep.subr.mxu0 0.0
    %226 = vmatpush1.msra.mxu0 0.0
    %227 = vmatprep.mubr.f32.mxu0 0.0
    %v228 = vand.u32 %v49, 4294901760
    %229 = vmatmul.mubr.f32.gmra.mrb[0].mxu0 %v228
    %v230 = vpop.f32.mrb[0].mxu0
    %v231 = vadd.f32 %v130, %v230
    %v232 = vpop.f32.mrb[0].mxu0
    %233 = vmatprep.mubr.f32.mxu0 0.0
    %v234 = vand.u32 %v52, 4294901760
    %235 = vmatmul.mubr.f32.gmra.mrb[0].mxu0 %v234
    %v236 = vpop.f32.mrb[0].mxu0
    %v237 = vadd.f32 %v140, %v236
    %v238 = vpop.f32.mrb[0].mxu0
    %239 = vdwg.mxu0
    %240 = vmatprep.subr.mxu0 0.0
    %v241 = vand.u32 %v36, 4294901760
    %v242 = vsub.f32 %v36, %v241
    %243 = vmatpush1.msra.mxu0 %v242
    %244 = vmatprep.subr.mxu0 0.0
    %v245 = vand.u32 %v37, 4294901760
    %v246 = vsub.f32 %v37, %v245
    %247 = vmatpush1.msra.mxu0 %v246
    %248 = vmatprep.subr.mxu0 0.0
    %v249 = vand.u32 %v38, 4294901760
    %v250 = vsub.f32 %v38, %v249
    %251 = vmatpush1.msra.mxu0 %v250
    %252 = vmatprep.subr.mxu0 0.0
    %v253 = vand.u32 %v39, 4294901760
    %v254 = vsub.f32 %v39, %v253
    %255 = vmatpush1.msra.mxu0 %v254
    %256 = vmatprep.subr.mxu0 0.0
    %257 = vmatpush1.msra.mxu0 0.0
    %258 = vmatprep.subr.mxu0 0.0
    %259 = vmatpush1.msra.mxu0 0.0
    %260 = vmatprep.subr.mxu0 0.0
    %261 = vmatpush1.msra.mxu0 0.0
    %262 = vmatprep.subr.mxu0 0.0
    %263 = vmatpush1.msra.mxu0 0.0
    %264 = vmatprep.subr.mxu0 0.0
    %265 = vmatpush1.msra.mxu0 0.0
    %266 = vmatprep.subr.mxu0 0.0
    %267 = vmatpush1.msra.mxu0 0.0
    %268 = vmatprep.subr.mxu0 0.0
    %269 = vmatpush1.msra.mxu0 0.0
    %270 = vmatprep.subr.mxu0 0.0
    %271 = vmatpush1.msra.mxu0 0.0
    %272 = vmatprep.subr.mxu0 0.0
    %273 = vmatpush1.msra.mxu0 0.0
    %274 = vmatprep.subr.mxu0 0.0
    %275 = vmatpush1.msra.mxu0 0.0
    %276 = vmatprep.subr.mxu0 0.0
    %277 = vmatpush1.msra.mxu0 0.0
    %278 = vmatprep.subr.mxu0 0.0
    %279 = vmatpush1.msra.mxu0 0.0
    %280 = vmatprep.subr.mxu0 0.0
    %281 = vmatpush1.msra.mxu0 0.0
    %282 = vmatprep.subr.mxu0 0.0
    %283 = vmatpush1.msra.mxu0 0.0
    %284 = vmatprep.subr.mxu0 0.0
    %285 = vmatpush1.msra.mxu0 0.0
    %286 = vmatprep.subr.mxu0 0.0
    %287 = vmatpush1.msra.mxu0 0.0
    %288 = vmatprep.subr.mxu0 0.0
    %289 = vmatpush1.msra.mxu0 0.0
    %290 = vmatprep.subr.mxu0 0.0
    %291 = vmatpush1.msra.mxu0 0.0
    %292 = vmatprep.subr.mxu0 0.0
    %293 = vmatpush1.msra.mxu0 0.0
    %294 = vmatprep.subr.mxu0 0.0
    %295 = vmatpush1.msra.mxu0 0.0
    %296 = vmatprep.subr.mxu0 0.0
    %297 = vmatpush1.msra.mxu0 0.0
    %298 = vmatprep.subr.mxu0 0.0
    %299 = vmatpush1.msra.mxu0 0.0
    %300 = vmatprep.subr.mxu0 0.0
    %301 = vmatpush1.msra.mxu0 0.0
    %302 = vmatprep.subr.mxu0 0.0
    %303 = vmatpush1.msra.mxu0 0.0
    %304 = vmatprep.subr.mxu0 0.0
    %305 = vmatpush1.msra.mxu0 0.0
    %306 = vmatprep.subr.mxu0 0.0
    %307 = vmatpush1.msra.mxu0 0.0
    %308 = vmatprep.subr.mxu0 0.0
    %309 = vmatpush1.msra.mxu0 0.0
    %310 = vmatprep.subr.mxu0 0.0
    %311 = vmatpush1.msra.mxu0 0.0
    %312 = vmatprep.mubr.f32.mxu0 0.0
    %v313 = vand.u32 %v49, 4294901760
    %v314 = vsub.f32 %v49, %v313
    %315 = vmatmul.mubr.f32.gmra.mrb[0].mxu0 %v314
    %v316 = vpop.f32.mrb[0].mxu0
    %v317 = vadd.f32 %v231, %v316
    %v318 = vpop.f32.mrb[0].mxu0
    %319 = vmatprep.mubr.f32.mxu0 0.0
    %v320 = vand.u32 %v52, 4294901760
    %v321 = vsub.f32 %v52, %v320
    %322 = vmatmul.mubr.f32.gmra.mrb[0].mxu0 %v321
    %v323 = vpop.f32.mrb[0].mxu0
    %v324 = vadd.f32 %v237, %v323
    %v325 = vpop.f32.mrb[0].mxu0
    %326 = vdwg.mxu0
    %327 = vmatprep.subr.mxu0 0.0
    %v328 = vand.u32 %v36, 4294901760
    %329 = vmatpush1.msra.mxu0 %v328
    %330 = vmatprep.subr.mxu0 0.0
    %v331 = vand.u32 %v37, 4294901760
    %332 = vmatpush1.msra.mxu0 %v331
    %333 = vmatprep.subr.mxu0 0.0
    %v334 = vand.u32 %v38, 4294901760
    %335 = vmatpush1.msra.mxu0 %v334
    %336 = vmatprep.subr.mxu0 0.0
    %v337 = vand.u32 %v39, 4294901760
    %338 = vmatpush1.msra.mxu0 %v337
    %339 = vmatprep.subr.mxu0 0.0
    %340 = vmatpush1.msra.mxu0 0.0
    %341 = vmatprep.subr.mxu0 0.0
    %342 = vmatpush1.msra.mxu0 0.0
    %343 = vmatprep.subr.mxu0 0.0
    %344 = vmatpush1.msra.mxu0 0.0
    %345 = vmatprep.subr.mxu0 0.0
    %346 = vmatpush1.msra.mxu0 0.0
    %347 = vmatprep.subr.mxu0 0.0
    %348 = vmatpush1.msra.mxu0 0.0
    %349 = vmatprep.subr.mxu0 0.0
    %350 = vmatpush1.msra.mxu0 0.0
    %351 = vmatprep.subr.mxu0 0.0
    %352 = vmatpush1.msra.mxu0 0.0
    %353 = vmatprep.subr.mxu0 0.0
    %354 = vmatpush1.msra.mxu0 0.0
    %355 = vmatprep.subr.mxu0 0.0
    %356 = vmatpush1.msra.mxu0 0.0
    %357 = vmatprep.subr.mxu0 0.0
    %358 = vmatpush1.msra.mxu0 0.0
    %359 = vmatprep.subr.mxu0 0.0
    %360 = vmatpush1.msra.mxu0 0.0
    %361 = vmatprep.subr.mxu0 0.0
    %362 = vmatpush1.msra.mxu0 0.0
    %363 = vmatprep.subr.mxu0 0.0
    %364 = vmatpush1.msra.mxu0 0.0
    %365 = vmatprep.subr.mxu0 0.0
    %366 = vmatpush1.msra.mxu0 0.0
    %367 = vmatprep.subr.mxu0 0.0
    %368 = vmatpush1.msra.mxu0 0.0
    %369 = vmatprep.subr.mxu0 0.0
    %370 = vmatpush1.msra.mxu0 0.0
    %371 = vmatprep.subr.mxu0 0.0
    %372 = vmatpush1.msra.mxu0 0.0
    %373 = vmatprep.subr.mxu0 0.0
    %374 = vmatpush1.msra.mxu0 0.0
    %375 = vmatprep.subr.mxu0 0.0
    %376 = vmatpush1.msra.mxu0 0.0
    %377 = vmatprep.subr.mxu0 0.0
    %378 = vmatpush1.msra.mxu0 0.0
    %379 = vmatprep.subr.mxu0 0.0
    %380 = vmatpush1.msra.mxu0 0.0
    %381 = vmatprep.subr.mxu0 0.0
    %382 = vmatpush1.msra.mxu0 0.0
    %383 = vmatprep.subr.mxu0 0.0
    %384 = vmatpush1.msra.mxu0 0.0
    %385 = vmatprep.subr.mxu0 0.0
    %386 = vmatpush1.msra.mxu0 0.0
    %387 = vmatprep.subr.mxu0 0.0
    %388 = vmatpush1.msra.mxu0 0.0
    %389 = vmatprep.subr.mxu0 0.0
    %390 = vmatpush1.msra.mxu0 0.0
    %391 = vmatprep.subr.mxu0 0.0
    %392 = vmatpush1.msra.mxu0 0.0
    %393 = vmatprep.subr.mxu0 0.0
    %394 = vmatpush1.msra.mxu0 0.0
    %395 = vmatprep.mubr.f32.mxu0 0.0
    %v396 = vand.u32 %v49, 4294901760
    %v397 = vsub.f32 %v49, %v396
    %v398 = vand.u32 %v397, 4294901760
    %399 = vmatmul.mubr.f32.gmra.mrb[0].mxu0 %v398
    %v400 = vpop.f32.mrb[0].mxu0
    %v401 = vadd.f32 %v317, %v400
    %v402 = vpop.f32.mrb[0].mxu0
    %403 = vmatprep.mubr.f32.mxu0 0.0
    %v404 = vand.u32 %v52, 4294901760
    %v405 = vsub.f32 %v52, %v404
    %v406 = vand.u32 %v405, 4294901760
    %407 = vmatmul.mubr.f32.gmra.mrb[0].mxu0 %v406
    %v408 = vpop.f32.mrb[0].mxu0
    %v409 = vadd.f32 %v324, %v408
    %v410 = vpop.f32.mrb[0].mxu0
    %411 = vdwg.mxu0
    %412 = vmatprep.subr.mxu0 0.0
    %v413 = vand.u32 %v36, 4294901760
    %v414 = vsub.f32 %v36, %v413
    %v415 = vand.u32 %v414, 4294901760
    %416 = vmatpush1.msra.mxu0 %v415
    %417 = vmatprep.subr.mxu0 0.0
    %v418 = vand.u32 %v37, 4294901760
    %v419 = vsub.f32 %v37, %v418
    %v420 = vand.u32 %v419, 4294901760
    %421 = vmatpush1.msra.mxu0 %v420
    %422 = vmatprep.subr.mxu0 0.0
    %v423 = vand.u32 %v38, 4294901760
    %v424 = vsub.f32 %v38, %v423
    %v425 = vand.u32 %v424, 4294901760
    %426 = vmatpush1.msra.mxu0 %v425
    %427 = vmatprep.subr.mxu0 0.0
    %v428 = vand.u32 %v39, 4294901760
    %v429 = vsub.f32 %v39, %v428
    %v430 = vand.u32 %v429, 4294901760
    %431 = vmatpush1.msra.mxu0 %v430
    %432 = vmatprep.subr.mxu0 0.0
    %433 = vmatpush1.msra.mxu0 0.0
    %434 = vmatprep.subr.mxu0 0.0
    %435 = vmatpush1.msra.mxu0 0.0
    %436 = vmatprep.subr.mxu0 0.0
    %437 = vmatpush1.msra.mxu0 0.0
    %438 = vmatprep.subr.mxu0 0.0
    %439 = vmatpush1.msra.mxu0 0.0
    %440 = vmatprep.subr.mxu0 0.0
    %441 = vmatpush1.msra.mxu0 0.0
    %442 = vmatprep.subr.mxu0 0.0
    %443 = vmatpush1.msra.mxu0 0.0
    %444 = vmatprep.subr.mxu0 0.0
    %445 = vmatpush1.msra.mxu0 0.0
    %446 = vmatprep.subr.mxu0 0.0
    %447 = vmatpush1.msra.mxu0 0.0
    %448 = vmatprep.subr.mxu0 0.0
    %449 = vmatpush1.msra.mxu0 0.0
    %450 = vmatprep.subr.mxu0 0.0
    %451 = vmatpush1.msra.mxu0 0.0
    %452 = vmatprep.subr.mxu0 0.0
    %453 = vmatpush1.msra.mxu0 0.0
    %454 = vmatprep.subr.mxu0 0.0
    %455 = vmatpush1.msra.mxu0 0.0
    %456 = vmatprep.subr.mxu0 0.0
    %457 = vmatpush1.msra.mxu0 0.0
    %458 = vmatprep.subr.mxu0 0.0
    %459 = vmatpush1.msra.mxu0 0.0
    %460 = vmatprep.subr.mxu0 0.0
    %461 = vmatpush1.msra.mxu0 0.0
    %462 = vmatprep.subr.mxu0 0.0
    %463 = vmatpush1.msra.mxu0 0.0
    %464 = vmatprep.subr.mxu0 0.0
    %465 = vmatpush1.msra.mxu0 0.0
    %466 = vmatprep.subr.mxu0 0.0
    %467 = vmatpush1.msra.mxu0 0.0
    %468 = vmatprep.subr.mxu0 0.0
    %469 = vmatpush1.msra.mxu0 0.0
    %470 = vmatprep.subr.mxu0 0.0
    %471 = vmatpush1.msra.mxu0 0.0
    %472 = vmatprep.subr.mxu0 0.0
    %473 = vmatpush1.msra.mxu0 0.0
    %474 = vmatprep.subr.mxu0 0.0
    %475 = vmatpush1.msra.mxu0 0.0
    %476 = vmatprep.subr.mxu0 0.0
    %477 = vmatpush1.msra.mxu0 0.0
    %478 = vmatprep.subr.mxu0 0.0
    %479 = vmatpush1.msra.mxu0 0.0
    %480 = vmatprep.subr.mxu0 0.0
    %481 = vmatpush1.msra.mxu0 0.0
    %482 = vmatprep.subr.mxu0 0.0
    %483 = vmatpush1.msra.mxu0 0.0
    %484 = vmatprep.subr.mxu0 0.0
    %485 = vmatpush1.msra.mxu0 0.0
    %486 = vmatprep.subr.mxu0 0.0
    %487 = vmatpush1.msra.mxu0 0.0
    %488 = vmatprep.mubr.f32.mxu0 0.0
    %v489 = vand.u32 %v49, 4294901760
    %490 = vmatmul.mubr.f32.gmra.mrb[0].mxu0 %v489
    %v491 = vpop.f32.mrb[0].mxu0
    %v492 = vadd.f32 %v401, %v491
    %v493 = vpop.f32.mrb[0].mxu0
    %494 = vmatprep.mubr.f32.mxu0 0.0
    %v495 = vand.u32 %v52, 4294901760
    %496 = vmatmul.mubr.f32.gmra.mrb[0].mxu0 %v495
    %v497 = vpop.f32.mrb[0].mxu0
    %v498 = vadd.f32 %v409, %v497
    %v499 = vpop.f32.mrb[0].mxu0
    %500 = vdwg.mxu0
    %501 = vmatprep.subr.mxu0 0.0
    %v502 = vand.u32 %v36, 4294901760
    %503 = vmatpush1.msra.mxu0 %v502
    %504 = vmatprep.subr.mxu0 0.0
    %v505 = vand.u32 %v37, 4294901760
    %506 = vmatpush1.msra.mxu0 %v505
    %507 = vmatprep.subr.mxu0 0.0
    %v508 = vand.u32 %v38, 4294901760
    %509 = vmatpush1.msra.mxu0 %v508
    %510 = vmatprep.subr.mxu0 0.0
    %v511 = vand.u32 %v39, 4294901760
    %512 = vmatpush1.msra.mxu0 %v511
    %513 = vmatprep.subr.mxu0 0.0
    %514 = vmatpush1.msra.mxu0 0.0
    %515 = vmatprep.subr.mxu0 0.0
    %516 = vmatpush1.msra.mxu0 0.0
    %517 = vmatprep.subr.mxu0 0.0
    %518 = vmatpush1.msra.mxu0 0.0
    %519 = vmatprep.subr.mxu0 0.0
    %520 = vmatpush1.msra.mxu0 0.0
    %521 = vmatprep.subr.mxu0 0.0
    %522 = vmatpush1.msra.mxu0 0.0
    %523 = vmatprep.subr.mxu0 0.0
    %524 = vmatpush1.msra.mxu0 0.0
    %525 = vmatprep.subr.mxu0 0.0
    %526 = vmatpush1.msra.mxu0 0.0
    %527 = vmatprep.subr.mxu0 0.0
    %528 = vmatpush1.msra.mxu0 0.0
    %529 = vmatprep.subr.mxu0 0.0
    %530 = vmatpush1.msra.mxu0 0.0
    %531 = vmatprep.subr.mxu0 0.0
    %532 = vmatpush1.msra.mxu0 0.0
    %533 = vmatprep.subr.mxu0 0.0
    %534 = vmatpush1.msra.mxu0 0.0
    %535 = vmatprep.subr.mxu0 0.0
    %536 = vmatpush1.msra.mxu0 0.0
    %537 = vmatprep.subr.mxu0 0.0
    %538 = vmatpush1.msra.mxu0 0.0
    %539 = vmatprep.subr.mxu0 0.0
    %540 = vmatpush1.msra.mxu0 0.0
    %541 = vmatprep.subr.mxu0 0.0
    %542 = vmatpush1.msra.mxu0 0.0
    %543 = vmatprep.subr.mxu0 0.0
    %544 = vmatpush1.msra.mxu0 0.0
    %545 = vmatprep.subr.mxu0 0.0
    %546 = vmatpush1.msra.mxu0 0.0
    %547 = vmatprep.subr.mxu0 0.0
    %548 = vmatpush1.msra.mxu0 0.0
    %549 = vmatprep.subr.mxu0 0.0
    %550 = vmatpush1.msra.mxu0 0.0
    %551 = vmatprep.subr.mxu0 0.0
    %552 = vmatpush1.msra.mxu0 0.0
    %553 = vmatprep.subr.mxu0 0.0
    %554 = vmatpush1.msra.mxu0 0.0
    %555 = vmatprep.subr.mxu0 0.0
    %556 = vmatpush1.msra.mxu0 0.0
    %557 = vmatprep.subr.mxu0 0.0
    %558 = vmatpush1.msra.mxu0 0.0
    %559 = vmatprep.subr.mxu0 0.0
    %560 = vmatpush1.msra.mxu0 0.0
    %561 = vmatprep.subr.mxu0 0.0
    %562 = vmatpush1.msra.mxu0 0.0
    %563 = vmatprep.subr.mxu0 0.0
    %564 = vmatpush1.msra.mxu0 0.0
    %565 = vmatprep.subr.mxu0 0.0
    %566 = vmatpush1.msra.mxu0 0.0
    %567 = vmatprep.subr.mxu0 0.0
    %568 = vmatpush1.msra.mxu0 0.0
    %569 = vmatprep.mubr.f32.mxu0 0.0
    %v570 = vand.u32 %v49, 4294901760
    %571 = vmatmul.mubr.f32.gmra.mrb[0].mxu0 %v570
    %v572 = vpop.f32.mrb[0].mxu0
    %v573 = vadd.f32 %v492, %v572
    %v574 = vpop.f32.mrb[0].mxu0
    %575 = vmatprep.mubr.f32.mxu0 0.0
    %v576 = vand.u32 %v52, 4294901760
    %577 = vmatmul.mubr.f32.gmra.mrb[0].mxu0 %v576
    %v578 = vpop.f32.mrb[0].mxu0
    %v579 = vadd.f32 %v498, %v578
    %v580 = vpop.f32.mrb[0].mxu0
    %581 = vdwg.mxu0
    %v582 = vmax.f32 %v573, 0.0
    %v583 = vmax.f32 %v579, 0.0
    %v584 = vld [vmem:[%s3] sm:$0xff]
    %v585 = vld [vmem:[%s3 + $0x8] sm:$0xff]
    %v586 = vld [vmem:[%s3 + $0x10] sm:$0xff]
    %v587 = vld [vmem:[%s3 + $0x18] sm:$0xff]
    %v588 = vld [vmem:[%s4] sm:$0x1]
    %v590 = vlaneseq
    %v591 = vshrl.u32 %v590, 7
    %v592 = vsub.s32 0, %v591
    %v593 = vrot.slane %v588, %v592
    %v596 = vsel %vm47, %v582, 0
    %v599 = vsel %vm47, %v583, 0
    %601 = vmatprep.subr.mxu0 0.0
    %v602 = vand.u32 %v584, 4294901760
    %603 = vmatpush1.msra.mxu0 %v602
    %604 = vmatprep.subr.mxu0 0.0
    %v605 = vand.u32 %v585, 4294901760
    %606 = vmatpush1.msra.mxu0 %v605
    %607 = vmatprep.subr.mxu0 0.0
    %v608 = vand.u32 %v586, 4294901760
    %609 = vmatpush1.msra.mxu0 %v608
    %610 = vmatprep.subr.mxu0 0.0
    %v611 = vand.u32 %v587, 4294901760
    %612 = vmatpush1.msra.mxu0 %v611
    %613 = vmatprep.subr.mxu0 0.0
    %614 = vmatpush1.msra.mxu0 0.0
    %615 = vmatprep.subr.mxu0 0.0
    %616 = vmatpush1.msra.mxu0 0.0
    %617 = vmatprep.subr.mxu0 0.0
    %618 = vmatpush1.msra.mxu0 0.0
    %619 = vmatprep.subr.mxu0 0.0
    %620 = vmatpush1.msra.mxu0 0.0
    %621 = vmatprep.subr.mxu0 0.0
    %622 = vmatpush1.msra.mxu0 0.0
    %623 = vmatprep.subr.mxu0 0.0
    %624 = vmatpush1.msra.mxu0 0.0
    %625 = vmatprep.subr.mxu0 0.0
    %626 = vmatpush1.msra.mxu0 0.0
    %627 = vmatprep.subr.mxu0 0.0
    %628 = vmatpush1.msra.mxu0 0.0
    %629 = vmatprep.subr.mxu0 0.0
    %630 = vmatpush1.msra.mxu0 0.0
    %631 = vmatprep.subr.mxu0 0.0
    %632 = vmatpush1.msra.mxu0 0.0
    %633 = vmatprep.subr.mxu0 0.0
    %634 = vmatpush1.msra.mxu0 0.0
    %635 = vmatprep.subr.mxu0 0.0
    %636 = vmatpush1.msra.mxu0 0.0
    %637 = vmatprep.subr.mxu0 0.0
    %638 = vmatpush1.msra.mxu0 0.0
    %639 = vmatprep.subr.mxu0 0.0
    %640 = vmatpush1.msra.mxu0 0.0
    %641 = vmatprep.subr.mxu0 0.0
    %642 = vmatpush1.msra.mxu0 0.0
    %643 = vmatprep.subr.mxu0 0.0
    %644 = vmatpush1.msra.mxu0 0.0
    %645 = vmatprep.subr.mxu0 0.0
    %646 = vmatpush1.msra.mxu0 0.0
    %647 = vmatprep.subr.mxu0 0.0
    %648 = vmatpush1.msra.mxu0 0.0
    %649 = vmatprep.subr.mxu0 0.0
    %650 = vmatpush1.msra.mxu0 0.0
    %651 = vmatprep.subr.mxu0 0.0
    %652 = vmatpush1.msra.mxu0 0.0
    %653 = vmatprep.subr.mxu0 0.0
    %654 = vmatpush1.msra.mxu0 0.0
    %655 = vmatprep.subr.mxu0 0.0
    %656 = vmatpush1.msra.mxu0 0.0
    %657 = vmatprep.subr.mxu0 0.0
    %658 = vmatpush1.msra.mxu0 0.0
    %659 = vmatprep.subr.mxu0 0.0
    %660 = vmatpush1.msra.mxu0 0.0
    %661 = vmatprep.subr.mxu0 0.0
    %662 = vmatpush1.msra.mxu0 0.0
    %663 = vmatprep.subr.mxu0 0.0
    %664 = vmatpush1.msra.mxu0 0.0
    %665 = vmatprep.subr.mxu0 0.0
    %666 = vmatpush1.msra.mxu0 0.0
    %667 = vmatprep.subr.mxu0 0.0
    %668 = vmatpush1.msra.mxu0 0.0
    %669 = vmatprep.mubr.f32.mxu0 0.0
    %v670 = vand.u32 %v596, 4294901760
    %v671 = vsub.f32 %v596, %v670
    %v672 = vand.u32 %v671, 4294901760
    %v673 = vsub.f32 %v671, %v672
    %v674 = vand.u32 %v673, 4294901760
    %675 = vmatmul.mubr.f32.gmra.mrb[0].mxu0 %v674
    %v676 = vpop.f32.mrb[0].mxu0
    %v677 = vadd.f32 %v593, %v676
    %v678 = vpop.f32.mrb[0].mxu0
    %679 = vmatprep.mubr.f32.mxu0 0.0
    %v680 = vand.u32 %v599, 4294901760
    %v681 = vsub.f32 %v599, %v680
    %v682 = vand.u32 %v681, 4294901760
    %v683 = vsub.f32 %v681, %v682
    %v684 = vand.u32 %v683, 4294901760
    %685 = vmatmul.mubr.f32.gmra.mrb[0].mxu0 %v684
    %v686 = vpop.f32.mrb[0].mxu0
    %v687 = vadd.f32 %v593, %v686
    %v688 = vpop.f32.mrb[0].mxu0
    %689 = vdwg.mxu0
    %690 = vmatprep.subr.mxu0 0.0
    %v691 = vand.u32 %v584, 4294901760
    %v692 = vsub.f32 %v584, %v691
    %v693 = vand.u32 %v692, 4294901760
    %v694 = vsub.f32 %v692, %v693
    %v695 = vand.u32 %v694, 4294901760
    %696 = vmatpush1.msra.mxu0 %v695
    %697 = vmatprep.subr.mxu0 0.0
    %v698 = vand.u32 %v585, 4294901760
    %v699 = vsub.f32 %v585, %v698
    %v700 = vand.u32 %v699, 4294901760
    %v701 = vsub.f32 %v699, %v700
    %v702 = vand.u32 %v701, 4294901760
    %703 = vmatpush1.msra.mxu0 %v702
    %704 = vmatprep.subr.mxu0 0.0
    %v705 = vand.u32 %v586, 4294901760
    %v706 = vsub.f32 %v586, %v705
    %v707 = vand.u32 %v706, 4294901760
    %v708 = vsub.f32 %v706, %v707
    %v709 = vand.u32 %v708, 4294901760
    %710 = vmatpush1.msra.mxu0 %v709
    %711 = vmatprep.subr.mxu0 0.0
    %v712 = vand.u32 %v587, 4294901760
    %v713 = vsub.f32 %v587, %v712
    %v714 = vand.u32 %v713, 4294901760
    %v715 = vsub.f32 %v713, %v714
    %v716 = vand.u32 %v715, 4294901760
    %717 = vmatpush1.msra.mxu0 %v716
    %718 = vmatprep.subr.mxu0 0.0
    %719 = vmatpush1.msra.mxu0 0.0
    %720 = vmatprep.subr.mxu0 0.0
    %721 = vmatpush1.msra.mxu0 0.0
    %722 = vmatprep.subr.mxu0 0.0
    %723 = vmatpush1.msra.mxu0 0.0
    %724 = vmatprep.subr.mxu0 0.0
    %725 = vmatpush1.msra.mxu0 0.0
    %726 = vmatprep.subr.mxu0 0.0
    %727 = vmatpush1.msra.mxu0 0.0
    %728 = vmatprep.subr.mxu0 0.0
    %729 = vmatpush1.msra.mxu0 0.0
    %730 = vmatprep.subr.mxu0 0.0
    %731 = vmatpush1.msra.mxu0 0.0
    %732 = vmatprep.subr.mxu0 0.0
    %733 = vmatpush1.msra.mxu0 0.0
    %734 = vmatprep.subr.mxu0 0.0
    %735 = vmatpush1.msra.mxu0 0.0
    %736 = vmatprep.subr.mxu0 0.0
    %737 = vmatpush1.msra.mxu0 0.0
    %738 = vmatprep.subr.mxu0 0.0
    %739 = vmatpush1.msra.mxu0 0.0
    %740 = vmatprep.subr.mxu0 0.0
    %741 = vmatpush1.msra.mxu0 0.0
    %742 = vmatprep.subr.mxu0 0.0
    %743 = vmatpush1.msra.mxu0 0.0
    %744 = vmatprep.subr.mxu0 0.0
    %745 = vmatpush1.msra.mxu0 0.0
    %746 = vmatprep.subr.mxu0 0.0
    %747 = vmatpush1.msra.mxu0 0.0
    %748 = vmatprep.subr.mxu0 0.0
    %749 = vmatpush1.msra.mxu0 0.0
    %750 = vmatprep.subr.mxu0 0.0
    %751 = vmatpush1.msra.mxu0 0.0
    %752 = vmatprep.subr.mxu0 0.0
    %753 = vmatpush1.msra.mxu0 0.0
    %754 = vmatprep.subr.mxu0 0.0
    %755 = vmatpush1.msra.mxu0 0.0
    %756 = vmatprep.subr.mxu0 0.0
    %757 = vmatpush1.msra.mxu0 0.0
    %758 = vmatprep.subr.mxu0 0.0
    %759 = vmatpush1.msra.mxu0 0.0
    %760 = vmatprep.subr.mxu0 0.0
    %761 = vmatpush1.msra.mxu0 0.0
    %762 = vmatprep.subr.mxu0 0.0
    %763 = vmatpush1.msra.mxu0 0.0
    %764 = vmatprep.subr.mxu0 0.0
    %765 = vmatpush1.msra.mxu0 0.0
    %766 = vmatprep.subr.mxu0 0.0
    %767 = vmatpush1.msra.mxu0 0.0
    %768 = vmatprep.subr.mxu0 0.0
    %769 = vmatpush1.msra.mxu0 0.0
    %770 = vmatprep.subr.mxu0 0.0
    %771 = vmatpush1.msra.mxu0 0.0
    %772 = vmatprep.subr.mxu0 0.0
    %773 = vmatpush1.msra.mxu0 0.0
    %774 = vmatprep.mubr.f32.mxu0 0.0
    %v775 = vand.u32 %v596, 4294901760
    %776 = vmatmul.mubr.f32.gmra.mrb[0].mxu0 %v775
    %v777 = vpop.f32.mrb[0].mxu0
    %v778 = vadd.f32 %v677, %v777
    %v779 = vpop.f32.mrb[0].mxu0
    %780 = vmatprep.mubr.f32.mxu0 0.0
    %v781 = vand.u32 %v599, 4294901760
    %782 = vmatmul.mubr.f32.gmra.mrb[0].mxu0 %v781
    %v783 = vpop.f32.mrb[0].mxu0
    %v784 = vadd.f32 %v687, %v783
    %v785 = vpop.f32.mrb[0].mxu0
    %786 = vdwg.mxu0
    %787 = vmatprep.subr.mxu0 0.0
    %v788 = vand.u32 %v584, 4294901760
    %v789 = vsub.f32 %v584, %v788
    %790 = vmatpush1.msra.mxu0 %v789
    %791 = vmatprep.subr.mxu0 0.0
    %v792 = vand.u32 %v585, 4294901760
    %v793 = vsub.f32 %v585, %v792
    %794 = vmatpush1.msra.mxu0 %v793
    %795 = vmatprep.subr.mxu0 0.0
    %v796 = vand.u32 %v586, 4294901760
    %v797 = vsub.f32 %v586, %v796
    %798 = vmatpush1.msra.mxu0 %v797
    %799 = vmatprep.subr.mxu0 0.0
    %v800 = vand.u32 %v587, 4294901760
    %v801 = vsub.f32 %v587, %v800
    %802 = vmatpush1.msra.mxu0 %v801
    %803 = vmatprep.subr.mxu0 0.0
    %804 = vmatpush1.msra.mxu0 0.0
    %805 = vmatprep.subr.mxu0 0.0
    %806 = vmatpush1.msra.mxu0 0.0
    %807 = vmatprep.subr.mxu0 0.0
    %808 = vmatpush1.msra.mxu0 0.0
    %809 = vmatprep.subr.mxu0 0.0
    %810 = vmatpush1.msra.mxu0 0.0
    %811 = vmatprep.subr.mxu0 0.0
    %812 = vmatpush1.msra.mxu0 0.0
    %813 = vmatprep.subr.mxu0 0.0
    %814 = vmatpush1.msra.mxu0 0.0
    %815 = vmatprep.subr.mxu0 0.0
    %816 = vmatpush1.msra.mxu0 0.0
    %817 = vmatprep.subr.mxu0 0.0
    %818 = vmatpush1.msra.mxu0 0.0
    %819 = vmatprep.subr.mxu0 0.0
    %820 = vmatpush1.msra.mxu0 0.0
    %821 = vmatprep.subr.mxu0 0.0
    %822 = vmatpush1.msra.mxu0 0.0
    %823 = vmatprep.subr.mxu0 0.0
    %824 = vmatpush1.msra.mxu0 0.0
    %825 = vmatprep.subr.mxu0 0.0
    %826 = vmatpush1.msra.mxu0 0.0
    %827 = vmatprep.subr.mxu0 0.0
    %828 = vmatpush1.msra.mxu0 0.0
    %829 = vmatprep.subr.mxu0 0.0
    %830 = vmatpush1.msra.mxu0 0.0
    %831 = vmatprep.subr.mxu0 0.0
    %832 = vmatpush1.msra.mxu0 0.0
    %833 = vmatprep.subr.mxu0 0.0
    %834 = vmatpush1.msra.mxu0 0.0
    %835 = vmatprep.subr.mxu0 0.0
    %836 = vmatpush1.msra.mxu0 0.0
    %837 = vmatprep.subr.mxu0 0.0
    %838 = vmatpush1.msra.mxu0 0.0
    %839 = vmatprep.subr.mxu0 0.0
    %840 = vmatpush1.msra.mxu0 0.0
    %841 = vmatprep.subr.mxu0 0.0
    %842 = vmatpush1.msra.mxu0 0.0
    %843 = vmatprep.subr.mxu0 0.0
    %844 = vmatpush1.msra.mxu0 0.0
    %845 = vmatprep.subr.mxu0 0.0
    %846 = vmatpush1.msra.mxu0 0.0
    %847 = vmatprep.subr.mxu0 0.0
    %848 = vmatpush1.msra.mxu0 0.0
    %849 = vmatprep.subr.mxu0 0.0
    %850 = vmatpush1.msra.mxu0 0.0
    %851 = vmatprep.subr.mxu0 0.0
    %852 = vmatpush1.msra.mxu0 0.0
    %853 = vmatprep.subr.mxu0 0.0
    %854 = vmatpush1.msra.mxu0 0.0
    %855 = vmatprep.subr.mxu0 0.0
    %856 = vmatpush1.msra.mxu0 0.0
    %857 = vmatprep.subr.mxu0 0.0
    %858 = vmatpush1.msra.mxu0 0.0
    %859 = vmatprep.mubr.f32.mxu0 0.0
    %v860 = vand.u32 %v596, 4294901760
    %v861 = vsub.f32 %v596, %v860
    %862 = vmatmul.mubr.f32.gmra.mrb[0].mxu0 %v861
    %v863 = vpop.f32.mrb[0].mxu0
    %v864 = vadd.f32 %v778, %v863
    %v865 = vpop.f32.mrb[0].mxu0
    %866 = vmatprep.mubr.f32.mxu0 0.0
    %v867 = vand.u32 %v599, 4294901760
    %v868 = vsub.f32 %v599, %v867
    %869 = vmatmul.mubr.f32.gmra.mrb[0].mxu0 %v868
    %v870 = vpop.f32.mrb[0].mxu0
    %v871 = vadd.f32 %v784, %v870
    %v872 = vpop.f32.mrb[0].mxu0
    %873 = vdwg.mxu0
    %874 = vmatprep.subr.mxu0 0.0
    %v875 = vand.u32 %v584, 4294901760
    %876 = vmatpush1.msra.mxu0 %v875
    %877 = vmatprep.subr.mxu0 0.0
    %v878 = vand.u32 %v585, 4294901760
    %879 = vmatpush1.msra.mxu0 %v878
    %880 = vmatprep.subr.mxu0 0.0
    %v881 = vand.u32 %v586, 4294901760
    %882 = vmatpush1.msra.mxu0 %v881
    %883 = vmatprep.subr.mxu0 0.0
    %v884 = vand.u32 %v587, 4294901760
    %885 = vmatpush1.msra.mxu0 %v884
    %886 = vmatprep.subr.mxu0 0.0
    %887 = vmatpush1.msra.mxu0 0.0
    %888 = vmatprep.subr.mxu0 0.0
    %889 = vmatpush1.msra.mxu0 0.0
    %890 = vmatprep.subr.mxu0 0.0
    %891 = vmatpush1.msra.mxu0 0.0
    %892 = vmatprep.subr.mxu0 0.0
    %893 = vmatpush1.msra.mxu0 0.0
    %894 = vmatprep.subr.mxu0 0.0
    %895 = vmatpush1.msra.mxu0 0.0
    %896 = vmatprep.subr.mxu0 0.0
    %897 = vmatpush1.msra.mxu0 0.0
    %898 = vmatprep.subr.mxu0 0.0
    %899 = vmatpush1.msra.mxu0 0.0
    %900 = vmatprep.subr.mxu0 0.0
    %901 = vmatpush1.msra.mxu0 0.0
    %902 = vmatprep.subr.mxu0 0.0
    %903 = vmatpush1.msra.mxu0 0.0
    %904 = vmatprep.subr.mxu0 0.0
    %905 = vmatpush1.msra.mxu0 0.0
    %906 = vmatprep.subr.mxu0 0.0
    %907 = vmatpush1.msra.mxu0 0.0
    %908 = vmatprep.subr.mxu0 0.0
    %909 = vmatpush1.msra.mxu0 0.0
    %910 = vmatprep.subr.mxu0 0.0
    %911 = vmatpush1.msra.mxu0 0.0
    %912 = vmatprep.subr.mxu0 0.0
    %913 = vmatpush1.msra.mxu0 0.0
    %914 = vmatprep.subr.mxu0 0.0
    %915 = vmatpush1.msra.mxu0 0.0
    %916 = vmatprep.subr.mxu0 0.0
    %917 = vmatpush1.msra.mxu0 0.0
    %918 = vmatprep.subr.mxu0 0.0
    %919 = vmatpush1.msra.mxu0 0.0
    %920 = vmatprep.subr.mxu0 0.0
    %921 = vmatpush1.msra.mxu0 0.0
    %922 = vmatprep.subr.mxu0 0.0
    %923 = vmatpush1.msra.mxu0 0.0
    %924 = vmatprep.subr.mxu0 0.0
    %925 = vmatpush1.msra.mxu0 0.0
    %926 = vmatprep.subr.mxu0 0.0
    %927 = vmatpush1.msra.mxu0 0.0
    %928 = vmatprep.subr.mxu0 0.0
    %929 = vmatpush1.msra.mxu0 0.0
    %930 = vmatprep.subr.mxu0 0.0
    %931 = vmatpush1.msra.mxu0 0.0
    %932 = vmatprep.subr.mxu0 0.0
    %933 = vmatpush1.msra.mxu0 0.0
    %934 = vmatprep.subr.mxu0 0.0
    %935 = vmatpush1.msra.mxu0 0.0
    %936 = vmatprep.subr.mxu0 0.0
    %937 = vmatpush1.msra.mxu0 0.0
    %938 = vmatprep.subr.mxu0 0.0
    %939 = vmatpush1.msra.mxu0 0.0
    %940 = vmatprep.subr.mxu0 0.0
    %941 = vmatpush1.msra.mxu0 0.0
    %942 = vmatprep.mubr.f32.mxu0 0.0
    %v943 = vand.u32 %v596, 4294901760
    %v944 = vsub.f32 %v596, %v943
    %v945 = vand.u32 %v944, 4294901760
    %946 = vmatmul.mubr.f32.gmra.mrb[0].mxu0 %v945
    %v947 = vpop.f32.mrb[0].mxu0
    %v948 = vadd.f32 %v864, %v947
    %v949 = vpop.f32.mrb[0].mxu0
    %950 = vmatprep.mubr.f32.mxu0 0.0
    %v951 = vand.u32 %v599, 4294901760
    %v952 = vsub.f32 %v599, %v951
    %v953 = vand.u32 %v952, 4294901760
    %954 = vmatmul.mubr.f32.gmra.mrb[0].mxu0 %v953
    %v955 = vpop.f32.mrb[0].mxu0
    %v956 = vadd.f32 %v871, %v955
    %v957 = vpop.f32.mrb[0].mxu0
    %958 = vdwg.mxu0
    %959 = vmatprep.subr.mxu0 0.0
    %v960 = vand.u32 %v584, 4294901760
    %v961 = vsub.f32 %v584, %v960
    %v962 = vand.u32 %v961, 4294901760
    %963 = vmatpush1.msra.mxu0 %v962
    %964 = vmatprep.subr.mxu0 0.0
    %v965 = vand.u32 %v585, 4294901760
    %v966 = vsub.f32 %v585, %v965
    %v967 = vand.u32 %v966, 4294901760
    %968 = vmatpush1.msra.mxu0 %v967
    %969 = vmatprep.subr.mxu0 0.0
    %v970 = vand.u32 %v586, 4294901760
    %v971 = vsub.f32 %v586, %v970
    %v972 = vand.u32 %v971, 4294901760
    %973 = vmatpush1.msra.mxu0 %v972
    %974 = vmatprep.subr.mxu0 0.0
    %v975 = vand.u32 %v587, 4294901760
    %v976 = vsub.f32 %v587, %v975
    %v977 = vand.u32 %v976, 4294901760
    %978 = vmatpush1.msra.mxu0 %v977
    %979 = vmatprep.subr.mxu0 0.0
    %980 = vmatpush1.msra.mxu0 0.0
    %981 = vmatprep.subr.mxu0 0.0
    %982 = vmatpush1.msra.mxu0 0.0
    %983 = vmatprep.subr.mxu0 0.0
    %984 = vmatpush1.msra.mxu0 0.0
    %985 = vmatprep.subr.mxu0 0.0
    %986 = vmatpush1.msra.mxu0 0.0
    %987 = vmatprep.subr.mxu0 0.0
    %988 = vmatpush1.msra.mxu0 0.0
    %989 = vmatprep.subr.mxu0 0.0
    %990 = vmatpush1.msra.mxu0 0.0
    %991 = vmatprep.subr.mxu0 0.0
    %992 = vmatpush1.msra.mxu0 0.0
    %993 = vmatprep.subr.mxu0 0.0
    %994 = vmatpush1.msra.mxu0 0.0
    %995 = vmatprep.subr.mxu0 0.0
    %996 = vmatpush1.msra.mxu0 0.0
    %997 = vmatprep.subr.mxu0 0.0
    %998 = vmatpush1.msra.mxu0 0.0
    %999 = vmatprep.subr.mxu0 0.0
    %1000 = vmatpush1.msra.mxu0 0.0
    %1001 = vmatprep.subr.mxu0 0.0
    %1002 = vmatpush1.msra.mxu0 0.0
    %1003 = vmatprep.subr.mxu0 0.0
    %1004 = vmatpush1.msra.mxu0 0.0
    %1005 = vmatprep.subr.mxu0 0.0
    %1006 = vmatpush1.msra.mxu0 0.0
    %1007 = vmatprep.subr.mxu0 0.0
    %1008 = vmatpush1.msra.mxu0 0.0
    %1009 = vmatprep.subr.mxu0 0.0
    %1010 = vmatpush1.msra.mxu0 0.0
    %1011 = vmatprep.subr.mxu0 0.0
    %1012 = vmatpush1.msra.mxu0 0.0
    %1013 = vmatprep.subr.mxu0 0.0
    %1014 = vmatpush1.msra.mxu0 0.0
    %1015 = vmatprep.subr.mxu0 0.0
    %1016 = vmatpush1.msra.mxu0 0.0
    %1017 = vmatprep.subr.mxu0 0.0
    %1018 = vmatpush1.msra.mxu0 0.0
    %1019 = vmatprep.subr.mxu0 0.0
    %1020 = vmatpush1.msra.mxu0 0.0
    %1021 = vmatprep.subr.mxu0 0.0
    %1022 = vmatpush1.msra.mxu0 0.0
    %1023 = vmatprep.subr.mxu0 0.0
    %1024 = vmatpush1.msra.mxu0 0.0
    %1025 = vmatprep.subr.mxu0 0.0
    %1026 = vmatpush1.msra.mxu0 0.0
    %1027 = vmatprep.subr.mxu0 0.0
    %1028 = vmatpush1.msra.mxu0 0.0
    %1029 = vmatprep.subr.mxu0 0.0
    %1030 = vmatpush1.msra.mxu0 0.0
    %1031 = vmatprep.subr.mxu0 0.0
    %1032 = vmatpush1.msra.mxu0 0.0
    %1033 = vmatprep.subr.mxu0 0.0
    %1034 = vmatpush1.msra.mxu0 0.0
    %1035 = vmatprep.mubr.f32.mxu0 0.0
    %v1036 = vand.u32 %v596, 4294901760
    %1037 = vmatmul.mubr.f32.gmra.mrb[0].mxu0 %v1036
    %v1038 = vpop.f32.mrb[0].mxu0
    %v1039 = vadd.f32 %v948, %v1038
    %v1040 = vpop.f32.mrb[0].mxu0
    %1041 = vmatprep.mubr.f32.mxu0 0.0
    %v1042 = vand.u32 %v599, 4294901760
    %1043 = vmatmul.mubr.f32.gmra.mrb[0].mxu0 %v1042
    %v1044 = vpop.f32.mrb[0].mxu0
    %v1045 = vadd.f32 %v956, %v1044
    %v1046 = vpop.f32.mrb[0].mxu0
    %1047 = vdwg.mxu0
    %1048 = vmatprep.subr.mxu0 0.0
    %v1049 = vand.u32 %v584, 4294901760
    %1050 = vmatpush1.msra.mxu0 %v1049
    %1051 = vmatprep.subr.mxu0 0.0
    %v1052 = vand.u32 %v585, 4294901760
    %1053 = vmatpush1.msra.mxu0 %v1052
    %1054 = vmatprep.subr.mxu0 0.0
    %v1055 = vand.u32 %v586, 4294901760
    %1056 = vmatpush1.msra.mxu0 %v1055
    %1057 = vmatprep.subr.mxu0 0.0
    %v1058 = vand.u32 %v587, 4294901760
    %1059 = vmatpush1.msra.mxu0 %v1058
    %1060 = vmatprep.subr.mxu0 0.0
    %1061 = vmatpush1.msra.mxu0 0.0
    %1062 = vmatprep.subr.mxu0 0.0
    %1063 = vmatpush1.msra.mxu0 0.0
    %1064 = vmatprep.subr.mxu0 0.0
    %1065 = vmatpush1.msra.mxu0 0.0
    %1066 = vmatprep.subr.mxu0 0.0
    %1067 = vmatpush1.msra.mxu0 0.0
    %1068 = vmatprep.subr.mxu0 0.0
    %1069 = vmatpush1.msra.mxu0 0.0
    %1070 = vmatprep.subr.mxu0 0.0
    %1071 = vmatpush1.msra.mxu0 0.0
    %1072 = vmatprep.subr.mxu0 0.0
    %1073 = vmatpush1.msra.mxu0 0.0
    %1074 = vmatprep.subr.mxu0 0.0
    %1075 = vmatpush1.msra.mxu0 0.0
    %1076 = vmatprep.subr.mxu0 0.0
    %1077 = vmatpush1.msra.mxu0 0.0
    %1078 = vmatprep.subr.mxu0 0.0
    %1079 = vmatpush1.msra.mxu0 0.0
    %1080 = vmatprep.subr.mxu0 0.0
    %1081 = vmatpush1.msra.mxu0 0.0
    %1082 = vmatprep.subr.mxu0 0.0
    %1083 = vmatpush1.msra.mxu0 0.0
    %1084 = vmatprep.subr.mxu0 0.0
    %1085 = vmatpush1.msra.mxu0 0.0
    %1086 = vmatprep.subr.mxu0 0.0
    %1087 = vmatpush1.msra.mxu0 0.0
    %1088 = vmatprep.subr.mxu0 0.0
    %1089 = vmatpush1.msra.mxu0 0.0
    %1090 = vmatprep.subr.mxu0 0.0
    %1091 = vmatpush1.msra.mxu0 0.0
    %1092 = vmatprep.subr.mxu0 0.0
    %1093 = vmatpush1.msra.mxu0 0.0
    %1094 = vmatprep.subr.mxu0 0.0
    %1095 = vmatpush1.msra.mxu0 0.0
    %1096 = vmatprep.subr.mxu0 0.0
    %1097 = vmatpush1.msra.mxu0 0.0
    %1098 = vmatprep.subr.mxu0 0.0
    %1099 = vmatpush1.msra.mxu0 0.0
    %1100 = vmatprep.subr.mxu0 0.0
    %1101 = vmatpush1.msra.mxu0 0.0
    %1102 = vmatprep.subr.mxu0 0.0
    %1103 = vmatpush1.msra.mxu0 0.0
    %1104 = vmatprep.subr.mxu0 0.0
    %1105 = vmatpush1.msra.mxu0 0.0
    %1106 = vmatprep.subr.mxu0 0.0
    %1107 = vmatpush1.msra.mxu0 0.0
    %1108 = vmatprep.subr.mxu0 0.0
    %1109 = vmatpush1.msra.mxu0 0.0
    %1110 = vmatprep.subr.mxu0 0.0
    %1111 = vmatpush1.msra.mxu0 0.0
    %1112 = vmatprep.subr.mxu0 0.0
    %1113 = vmatpush1.msra.mxu0 0.0
    %1114 = vmatprep.subr.mxu0 0.0
    %1115 = vmatpush1.msra.mxu0 0.0
    %1116 = vmatprep.mubr.f32.mxu0 0.0
    %v1117 = vand.u32 %v596, 4294901760
    %1118 = vmatmul.mubr.f32.gmra.mrb[0].mxu0 %v1117
    %v1119 = vpop.f32.mrb[0].mxu0
    %v1120 = vadd.f32 %v1039, %v1119
    %v1121 = vpop.f32.mrb[0].mxu0
    %1122 = vmatprep.mubr.f32.mxu0 0.0
    %v1123 = vand.u32 %v599, 4294901760
    %1124 = vmatmul.mubr.f32.gmra.mrb[0].mxu0 %v1123
    %v1125 = vpop.f32.mrb[0].mxu0
    %v1126 = vadd.f32 %v1045, %v1125
    %v1127 = vpop.f32.mrb[0].mxu0
    %1128 = vdwg.mxu0
    %v1129 = vsub.f32 0.0, %v1120
    %v1130 = vsub.f32 0.0, %v1126
    %v1131 = vmul.f32 %v1129, 1.442695
    %v1132 = vpow.pop %v1131
    %v1133 = vmul.f32 %v1130, 1.442695
    %v1134 = vpow.pop %v1133
    %v1135 = vadd.f32 %v1132, 1.0
    %v1136 = vadd.f32 %v1134, 1.0
    %v1137 = vrcp.pop %v1135
    %v1138 = vmul.f32 1.0, %v1137
    %v1139 = vrcp.pop %v1136
    %v1140 = vmul.f32 1.0, %v1139
    %vm1141 = vcmask 64512
    %1142 = vst.msk [vmem:[%s5] sm:$0xff] %vm1141, %v1138
    %1143 = vst.msk [vmem:[%s5 + $0x8] sm:$0xff] %vm1141, %v1140
    // Predicated region
    $region26: #{tpu_custom_call.1} parent=1 // pred_check
      _
    $region27: #{tpu_custom_call.1} parent=1 // pred_check_branch
      %1145 = sbr.rel (0) target = $region29
    $region28: #{tpu_custom_call.1} parent=1 // pred_region
      _
    $region29: #{tpu_custom_call.1} parent=1 // pred_fallthru
      _
    // Predicated region
    $region30: #{tpu_custom_call.1} parent=1 // pred_check
      _
    $region31: #{tpu_custom_call.1} parent=1 // pred_check_branch
      %1147 = sbr.rel (0) target = $region33
    $region32: #{tpu_custom_call.1} parent=1 // pred_region
      _
    $region33: #{tpu_custom_call.1} parent=1 // pred_fallthru
      _
    %1148 = vsyncpa [#allocation3], 1

</llo_original>
